<compile_context>
chip_gen: v7x
topology: tpu7x:2x2x1
jax: 0.10.0
libtpu: 0.0.40
codegen_flags: <defaults>
</compile_context>

<pallas_src>
import functools

import numpy as np
import jax
import jax.numpy as jnp
from jax import lax
from jax.experimental import pallas as pl
from jax.experimental.pallas import tpu as pltpu


TILE_R = 8  # image rows per grid step (sublane aligned)


# --------------------------------------------------------------------------
# Stage 1: ramp filtering  ==  (batch*nviews, ncols) @ (ncols, ncols) on MXU
# --------------------------------------------------------------------------
def _ramp_filter_kernel(sino_ref, fmat_ref, out_ref):
    out_ref[...] = jnp.dot(sino_ref[...], fmat_ref[...],
                           preferred_element_type=jnp.float32
                           ).astype(out_ref.dtype)


# --------------------------------------------------------------------------
# Stage 2: backprojection (one (TILE_R, dimx) image slab per grid step)
# --------------------------------------------------------------------------
def _backproject_kernel(use_mask, view_unroll,
                        cs_ref, filt_ref, mask_ref, img_ref):
    """cs_ref   : SMEM (2, nviews)          [cos(theta); sin(theta)]
       filt_ref : VMEM (1, nviews, ncols)   filtered sinogram for this batch
       mask_ref : VMEM (TILE_R, dimx)       circular-FOV mask slab
       img_ref  : VMEM (1, TILE_R, dimx)    output image slab
    """
    nviews = filt_ref.shape[1]
    ncols = filt_ref.shape[2]
    tile_r = img_ref.shape[1]
    dimx = img_ref.shape[2]

    half = (dimx - 1) / 2.0
    det_center = (ncols - 1) / 2.0
    r0 = pl.program_id(1) * tile_r
    scale = jnp.float32(np.pi / (2.0 * nviews))

    # hoisted loop invariants (broadcast_in_dim is not CSE'd -> build once)
    xc = lax.broadcasted_iota(jnp.float32, (1, dimx), 1) - half   # (1, dimx)
    det = lax.broadcasted_iota(jnp.int32, (ncols, 1), 0)          # (ncols, 1)

    for r in range(tile_r):                       # static, unrolled row loop
        ys = (r0 + r).astype(jnp.float32) - half  # scalar image-row coord

        def view_body(v, acc):
            c = cs_ref[0, v]
            s = cs_ref[1, v]
            t = xc * c + (ys * s + det_center)          # (1, dimx) detector coord
            t0 = jnp.floor(t)
            w = t - t0                                   # interpolation fraction
            t0i = t0.astype(jnp.int32)
            # linear-interpolation one-hot over detector bins.  Taps that fall
            # outside [0, ncols) simply have no matching bin -> zero
            # contribution (same semantics as the original kernel).
            wm = (jnp.where(det == t0i, 1.0 - w, 0.0)
                  + jnp.where(det == t0i + 1, w, 0.0))   # (ncols, dimx)
            row = filt_ref[0, pl.ds(v, 1), :]            # (1, ncols) filtered row
            # weighted gather + reduce on the MXU (co-issues with the VPU
            # one-hot build of the next unrolled view).
            return acc + jnp.dot(row, wm, preferred_element_type=jnp.float32)

        acc = lax.fori_loop(0, nviews, view_body,
                            jnp.zeros((1, dimx), jnp.float32),
                            unroll=view_unroll)

        img_row = acc * scale
        if use_mask:
            img_row = img_row * mask_ref[pl.ds(r, 1), :]
        img_row = jnp.maximum(img_row, 0.0)              # img[img < 0] = 0
        img_ref[0, pl.ds(r, 1), :] = img_row.astype(img_ref.dtype)


# --------------------------------------------------------------------------
# Host-side constant construction (same math as the PyTorch reference)
# --------------------------------------------------------------------------
def _ramp_filter_matrix(dimx, ncols):
    """FBP_Parallel.ramp_filter / filter_project as a circulant matrix."""
    size = max(64, int(2 ** np.ceil(np.log2(2 * dimx))))
    n = np.concatenate((np.arange(1, size / 2 + 1, 2, dtype=int),
                        np.arange(size / 2 - 1, 0, -2, dtype=int)))
    f = np.zeros(size)
    f[0] = 0.25
    f[1::2] = -1.0 / (np.pi * n) ** 2
    filt_freq = 2.0 * np.real(np.fft.fft(f))      # frequency-domain ramp
    h = np.real(np.fft.ifft(filt_freq))           # spatial kernel
    idx = (np.arange(ncols)[None, :] - np.arange(ncols)[:, None]) % size
    return h[idx].astype(np.float32)


def _circular_mask(size):
    """FBP_Parallel.create_circular_mask (single slice, as float)."""
    c = int(size / 2) - 0.5
    r = min(c, size - c)
    gy, gx = np.ogrid[0:size, 0:size]
    dist = np.sqrt((gy - c) ** 2 + (gx - c) ** 2)
    return (dist <= r).astype(np.float32)


# --------------------------------------------------------------------------
# Wrapper
# --------------------------------------------------------------------------
def fbp_parallel(sino, angles, dimx, use_mask=True):
    """sino: (batch, nviews, 1, ncols) float32 -> image (batch, 1, dimx, dimx)."""
    batch, nviews, nrows, ncols = sino.shape
    assert nrows == 1
    assert dimx % TILE_R == 0

    fmat = jnp.asarray(_ramp_filter_matrix(dimx, ncols))              # (ncols, ncols)
    mask = jnp.asarray(_circular_mask(dimx))                          # (dimx, dimx)
    cs = jnp.stack([jnp.cos(angles), jnp.sin(angles)], axis=0
                   ).astype(jnp.float32)                              # (2, nviews)

    # ---- stage 1: ramp filter, batch folded into M for MXU utilization ----
    rows_total = batch * nviews
    sino2d = sino.reshape(rows_total, ncols).astype(jnp.float32)
    tm = rows_total if rows_total <= 256 else 256
    filt_vmem = int(min(48 << 20, max(8 << 20,
                        2 * (2 * tm * ncols * 4 + ncols * ncols * 4) + (2 << 20))))
    filt2d = pl.pallas_call(
        _ramp_filter_kernel,
        out_shape=jax.ShapeDtypeStruct((rows_total, ncols), jnp.float32),
        grid=(pl.cdiv(rows_total, tm),),
        in_specs=[pl.BlockSpec((tm, ncols), lambda m: (m, 0)),
                  pl.BlockSpec((ncols, ncols), lambda m: (0, 0))],
        out_specs=pl.BlockSpec((tm, ncols), lambda m: (m, 0)),
        compiler_params=pltpu.CompilerParams(
            dimension_semantics=("parallel",),
            vmem_limit_bytes=filt_vmem),
    )(sino2d, fmat)
    filt3d = filt2d.reshape(batch, nviews, ncols)

    # ---- stage 2: backprojection, tiled over (batch, image-row slabs) ----
    view_unroll = max(u for u in (8, 4, 2, 1) if nviews % u == 0)
    n_row_tiles = dimx // TILE_R
    bp_vmem = int(min(48 << 20, max(8 << 20,
                      2 * (nviews * ncols * 4 + 2 * TILE_R * dimx * 4)
                      + view_unroll * ncols * dimx * 4 + (4 << 20))))
    kernel = functools.partial(_backproject_kernel, bool(use_mask), view_unroll)
    img3d = pl.pallas_call(
        kernel,
        out_shape=jax.ShapeDtypeStruct((batch, dimx, dimx), sino.dtype),
        grid=(batch, n_row_tiles),
        in_specs=[
            pl.BlockSpec(memory_space=pltpu.MemorySpace.SMEM),          # cos/sin (2, nviews)
            pl.BlockSpec((1, nviews, ncols), lambda b, r: (b, 0, 0)),   # filtered sinogram
            pl.BlockSpec((TILE_R, dimx), lambda b, r: (r, 0)),          # FOV mask slab
        ],
        out_specs=pl.BlockSpec((1, TILE_R, dimx), lambda b, r: (b, r, 0)),
        compiler_params=pltpu.CompilerParams(
            dimension_semantics=("parallel", "parallel"),
            vmem_limit_bytes=bp_vmem),
    )(cs, filt3d, mask)

    return img3d.reshape(batch, 1, dimx, dimx)


if __name__ == "__main__":
    key = jax.random.PRNGKey(0)
    batch, nviews, dimx = 2, 8, 16
    ncols = dimx  # reference pads up to filter_size_total, so ncols == dimx here

    sino = jax.random.uniform(key, (batch, nviews, 1, ncols), dtype=jnp.float32)
    # deterministic synthetic geometry: evenly spaced projection angles over [0, pi)
    angles = jnp.arange(nviews, dtype=jnp.float32) * (jnp.pi / nviews)

    img = fbp_parallel(sino, angles, dimx, use_mask=True)
    img = jax.block_until_ready(img)

    assert img.shape == (batch, 1, dimx, dimx)
    assert bool(jnp.all(jnp.isfinite(img)))
    assert bool(jnp.all(img >= 0.0))  # img[img < 0] = 0
    print("KERNEL_OK")
</pallas_src>

<mosaic_0001>
module attributes {stable_mosaic.version = 11 : i64} {
  func.func @_ramp_filter_kernel(%arg0: i32, %arg1: memref<16x16xf32, #tpu.memory_space<vmem>>, %arg2: memref<16x16xf32, #tpu.memory_space<vmem>>, %arg3: memref<16x16xf32, #tpu.memory_space<vmem>>) attributes {dimension_semantics = [#tpu.dimension_semantics<parallel>], iteration_bounds = array<i64: 1>, scalar_prefetch = 0 : i64, scratch_operands = 0 : i64, tpu.core_type = #tpu.core_type<tc>, window_params = [{transform_indices = @transform_0, window_bounds = array<i64: 16, 16>}, {pipeline_mode = #tpu.pipeline_mode<synchronous>, transform_indices = @transform_1, window_bounds = array<i64: 16, 16>}, {transform_indices = @transform_2, window_bounds = array<i64: 16, 16>}]} {
    %c0 = arith.constant 0 : index
    %c0_0 = arith.constant 0 : index
    %0 = vector.load %arg1[%c0, %c0_0] : memref<16x16xf32, #tpu.memory_space<vmem>>, vector<16x16xf32>
    %c0_1 = arith.constant 0 : index
    %c0_2 = arith.constant 0 : index
    %1 = vector.load %arg2[%c0_1, %c0_2] : memref<16x16xf32, #tpu.memory_space<vmem>>, vector<16x16xf32>
    %cst = arith.constant dense<0.000000e+00> : vector<16x16xf32>
    %2 = tpu.matmul %0, %1, %cst {dimension_numbers = #tpu.dot_dimension_numbers<[1], [0], [0], [1], [0, 0, 1, 1], [], []>} : vector<16x16xf32>, vector<16x16xf32>, vector<16x16xf32> -> vector<16x16xf32>
    %c0_3 = arith.constant 0 : index
    %c0_4 = arith.constant 0 : index
    %3 = vector.load %arg3[%c0_3, %c0_4] : memref<16x16xf32, #tpu.memory_space<vmem>>, vector<16x16xf32>
    tpu.vector_store %arg3[%c0_3, %c0_4], %2 {strides = array<i32>} : memref<16x16xf32, #tpu.memory_space<vmem>>, vector<16x16xf32>,
    return
  }
  func.func @transform_0(%arg0: i32) -> (i32, i32) {
    %c0_i32 = arith.constant 0 : i32
    %c0_i32_0 = arith.constant 0 : i32
    return %arg0, %c0_i32 : i32, i32
  }
  func.func @transform_1(%arg0: i32) -> (i32, i32) {
    %c0_i32 = arith.constant 0 : i32
    %c0_i32_0 = arith.constant 0 : i32
    %c0_i32_1 = arith.constant 0 : i32
    return %c0_i32, %c0_i32_0 : i32, i32
  }
  func.func @transform_2(%arg0: i32) -> (i32, i32) {
    %c0_i32 = arith.constant 0 : i32
    %c0_i32_0 = arith.constant 0 : i32
    return %arg0, %c0_i32 : i32, i32
  }
}

</mosaic_0001>

<llo_original>
// kernel: tpu_custom_call.1
$region0: #{tpu_custom_call.1}
  #allocation0 [shape = 'u32[]', space=smem, size = 0x4, offset = 0x4, fixed_abs, tag = 'smem constant byte address 0x4 - core index']
  #allocation1 [shape = 'u32[144,128]{1,0:T(1,128)}', space=vmem, size = 0x12000, scoped, tag = 'internal scratch']
  %s0 = inlined_call_operand.hbm [shape: f32[16,16], index: 0, kind: input, shape index: {}]
  %s1 = inlined_call_operand.hbm [shape: f32[16,16], index: 1, kind: input, shape index: {}]
  %s2 = inlined_call_operand.hbm [shape: f32[16,16], index: 2, kind: output, shape index: {}]
  %s3 = sld [smem:[#allocation0]]
  $region26: #{tpu_custom_call.1} parent=0
    _
  %s5 = ssub.s32 1, %s3
  %s6 = scalar_select 0, %s5, %s3
  $region1: #{tpu_custom_call.1} parent=0
    #allocation2 [shape = 'u8[8192]{0}', space=vmem, size = 0x2000, scoped, tag = 'input window, operand 0, single buffered']
    #allocation3 [shape = 's32[1]{0}', space=sflag, size = 0x4, scoped, tag = 'scoped memory for tpu_custom_call.1']
    #allocation4 [shape = 's32[1]{0}', space=sflag, size = 0x4, scoped, tag = 'scoped memory for tpu_custom_call.1']
    #allocation5 [shape = 'u8[8192]{0}', space=vmem, size = 0x2000, scoped, tag = 'input window, operand 1, single buffered']
    #allocation6 [shape = 's32[1]{0}', space=sflag, size = 0x4, scoped, tag = 'scoped memory for tpu_custom_call.1']
    #allocation7 [shape = 'u8[8192]{0}', space=vmem, size = 0x2000, scoped, tag = 'output window, operand 0, single buffered']
    %7 = vsyncpa [#allocation3], 0
    %8 = vsyncpa [#allocation6], 0
    %9 = vsyncpa [#allocation4], 0
    // Predicated region
    $region2: #{tpu_custom_call.1} parent=1 // pred_check
      _
    $region3: #{tpu_custom_call.1} parent=1 // pred_check_branch
      %11 = sbr.rel (0) target = $region5
    $region4: #{tpu_custom_call.1} parent=1 // pred_region
      %s13 = ssub.s32 256, 256
      %14 = vsyncadd [#allocation3], %s13
      %s15 = sshll.u32 [#allocation2], 4
      %s16 = int_to_ptr.vmem [resolvable:$true] %s15
      %21 = dma.hbm_to_vmem [thread:$0]  %s0, 256, %s16, [#allocation3], 128, 128, 8
    $region5: #{tpu_custom_call.1} parent=1 // pred_fallthru
      _
    // Predicated region
    $region6: #{tpu_custom_call.1} parent=1 // pred_check
      _
    $region7: #{tpu_custom_call.1} parent=1 // pred_check_branch
      %23 = sbr.rel (0) target = $region9
    $region8: #{tpu_custom_call.1} parent=1 // pred_region
      %s25 = ssub.s32 256, 256
      %26 = vsyncadd [#allocation6], %s25
      %s27 = sshll.u32 [#allocation5], 4
      %s28 = int_to_ptr.vmem [resolvable:$true] %s27
      %33 = dma.hbm_to_vmem [thread:$0]  %s1, 256, %s28, [#allocation6], 128, 128, 8
    $region9: #{tpu_custom_call.1} parent=1 // pred_fallthru
      _
    // Predicated region
    $region10: #{tpu_custom_call.1} parent=1 // pred_check
      _
    $region11: #{tpu_custom_call.1} parent=1 // pred_check_branch
      %35 = sbr.rel (0) target = $region13
    $region12: #{tpu_custom_call.1} parent=1 // pred_region
      %36 = dma.done [#allocation3], 256
    $region13: #{tpu_custom_call.1} parent=1 // pred_fallthru
      _
    // Predicated region
    $region14: #{tpu_custom_call.1} parent=1 // pred_check
      _
    $region15: #{tpu_custom_call.1} parent=1 // pred_check_branch
      %38 = sbr.rel (0) target = $region17
    $region16: #{tpu_custom_call.1} parent=1 // pred_region
      %39 = dma.done [#allocation6], 256
    $region17: #{tpu_custom_call.1} parent=1 // pred_fallthru
      _
    %v40 = vld [vmem:[#allocation2] sm:$0xff]
    %v41 = vld [vmem:[#allocation2 + $0x8] sm:$0xff]
    %v42 = vld [vmem:[#allocation5] sm:$0xff]
    %v43 = vld [vmem:[#allocation5 + $0x8] sm:$0xff]
    %vm44 = vcmask 130048
    %v46 = vsel %vm44, %v40, 0
    %v49 = vsel %vm44, %v41, 0
    %51 = vmatprep.subr.mxu0 0.0
    %52 = vmatpush1.msra.mxu0 %v42
    %53 = vmatprep.subr.mxu0 0.0
    %54 = vmatpush1.msra.mxu0 %v43
    %55 = vmatprep.subr.mxu0 0.0
    %56 = vmatpush1.msra.mxu0 0.0
    %57 = vmatprep.subr.mxu0 0.0
    %58 = vmatpush1.msra.mxu0 0.0
    %59 = vmatprep.subr.mxu0 0.0
    %60 = vmatpush1.msra.mxu0 0.0
    %61 = vmatprep.subr.mxu0 0.0
    %62 = vmatpush1.msra.mxu0 0.0
    %63 = vmatprep.subr.mxu0 0.0
    %64 = vmatpush1.msra.mxu0 0.0
    %65 = vmatprep.subr.mxu0 0.0
    %66 = vmatpush1.msra.mxu0 0.0
    %67 = vmatprep.subr.mxu0 0.0
    %68 = vmatpush1.msra.mxu0 0.0
    %69 = vmatprep.subr.mxu0 0.0
    %70 = vmatpush1.msra.mxu0 0.0
    %71 = vmatprep.subr.mxu0 0.0
    %72 = vmatpush1.msra.mxu0 0.0
    %73 = vmatprep.subr.mxu0 0.0
    %74 = vmatpush1.msra.mxu0 0.0
    %75 = vmatprep.subr.mxu0 0.0
    %76 = vmatpush1.msra.mxu0 0.0
    %77 = vmatprep.subr.mxu0 0.0
    %78 = vmatpush1.msra.mxu0 0.0
    %79 = vmatprep.subr.mxu0 0.0
    %80 = vmatpush1.msra.mxu0 0.0
    %81 = vmatprep.subr.mxu0 0.0
    %82 = vmatpush1.msra.mxu0 0.0
    %83 = vmatprep.subr.mxu0 0.0
    %84 = vmatpush1.msra.mxu0 0.0
    %85 = vmatprep.subr.mxu0 0.0
    %86 = vmatpush1.msra.mxu0 0.0
    %87 = vmatprep.subr.mxu0 0.0
    %88 = vmatpush1.msra.mxu0 0.0
    %89 = vmatprep.subr.mxu0 0.0
    %90 = vmatpush1.msra.mxu0 0.0
    %91 = vmatprep.subr.mxu0 0.0
    %92 = vmatpush1.msra.mxu0 0.0
    %93 = vmatprep.subr.mxu0 0.0
    %94 = vmatpush1.msra.mxu0 0.0
    %95 = vmatprep.subr.mxu0 0.0
    %96 = vmatpush1.msra.mxu0 0.0
    %97 = vmatprep.subr.mxu0 0.0
    %98 = vmatpush1.msra.mxu0 0.0
    %99 = vmatprep.subr.mxu0 0.0
    %100 = vmatpush1.msra.mxu0 0.0
    %101 = vmatprep.subr.mxu0 0.0
    %102 = vmatpush1.msra.mxu0 0.0
    %103 = vmatprep.subr.mxu0 0.0
    %104 = vmatpush1.msra.mxu0 0.0
    %105 = vmatprep.subr.mxu0 0.0
    %106 = vmatpush1.msra.mxu0 0.0
    %107 = vmatprep.subr.mxu0 0.0
    %108 = vmatpush1.msra.mxu0 0.0
    %109 = vmatprep.subr.mxu0 0.0
    %110 = vmatpush1.msra.mxu0 0.0
    %111 = vmatprep.subr.mxu0 0.0
    %112 = vmatpush1.msra.mxu0 0.0
    %113 = vmatprep.subr.mxu0 0.0
    %114 = vmatpush1.msra.mxu0 0.0
    %115 = vmatprep.mubr.f32.mxu0 0.0
    %116 = vmatmul.mubr.f32.gmra.mrb[0].mxu0 %v46
    %v117 = vpop.f32.mrb[0].mxu0
    %v118 = vadd.f32 0.0, %v117
    %v119 = vpop.f32.mrb[0].mxu0
    %120 = vmatprep.mubr.f32.mxu0 0.0
    %121 = vmatmul.mubr.f32.gmra.mrb[0].mxu0 %v49
    %v122 = vpop.f32.mrb[0].mxu0
    %v123 = vadd.f32 0.0, %v122
    %v124 = vpop.f32.mrb[0].mxu0
    %125 = vdwg.mxu0
    %126 = vst.msk [vmem:[#allocation7] sm:$0xff] %vm44, %v118
    %127 = vst.msk [vmem:[#allocation7 + $0x8] sm:$0xff] %vm44, %v123
    // Predicated region
    $region18: #{tpu_custom_call.1} parent=1 // pred_check
      _
    $region19: #{tpu_custom_call.1} parent=1 // pred_check_branch
      %129 = sbr.rel (0) target = $region21
    $region20: #{tpu_custom_call.1} parent=1 // pred_region
      %s131 = ssub.s32 256, 256
      %132 = vsyncadd [#allocation4], %s131
      %s133 = sshll.u32 [#allocation7], 4
      %s134 = int_to_ptr.vmem [resolvable:$true] %s133
      %139 = dma.vmem_to_hbm [thread:$0]  %s134, 256, %s2, [#allocation4], 128, 128, 8
    $region21: #{tpu_custom_call.1} parent=1 // pred_fallthru
      _
    // Predicated region
    $region22: #{tpu_custom_call.1} parent=1 // pred_check
      _
    $region23: #{tpu_custom_call.1} parent=1 // pred_check_branch
      %141 = sbr.rel (0) target = $region25
    $region24: #{tpu_custom_call.1} parent=1 // pred_region
      %142 = dma.done [#allocation4], 256
    $region25: #{tpu_custom_call.1} parent=1 // pred_fallthru
      _
    %143 = vsyncpa [#allocation3], 1
    %144 = vsyncpa [#allocation6], 1
    %145 = vsyncpa [#allocation4], 1

</llo_original>
